<compile_context>
chip_gen: v7x
topology: tpu7x:2x2x1
jax: 0.10.0
libtpu: 0.0.40
codegen_flags: <defaults>
</compile_context>

<pallas_src>
import functools

import jax
import jax.numpy as jnp
from jax.experimental import pallas as pl
from jax.experimental.pallas import tpu as pltpu


# ----------------------------------------------------------------------------
# Tiling plan for the per-batch anchor (lane) axis.
# ----------------------------------------------------------------------------
def _round_up(x, m):
    return ((x + m - 1) // m) * m


def _plan_tiles(N, max_tile=65536, single_block_cutoff=16384, target_steps=2):
    """Pick (tile_n, N_pad) for the per-batch anchor axis.

    N <= single_block_cutoff: one whole-axis block (block dim == full array
    dim, so no 128-multiple requirement and no padding).  Larger N: the
    fewest tiles of at most `max_tile` lanes (>= target_steps so the parallel
    grid can be sharded across v7x's two TensorCores), each a multiple of
    128, sized to minimise padding.  `max_tile` must be a multiple of 128.
    """
    if N <= single_block_cutoff:
        return N, N
    n_steps = max(target_steps, pl.cdiv(N, max_tile))
    tile = min(max_tile, _round_up(pl.cdiv(N, n_steps), 128))
    return tile, _round_up(N, tile)


# ----------------------------------------------------------------------------
# Kernel: proposal scoring — per-anchor max over classes fused with the
# SCORE_THRESH_MINOR gating of class_agnostic_nms_minor, plus in-kernel
# masking of padded / out-of-range lanes to -inf.
# ----------------------------------------------------------------------------
def _gated_score_kernel(score_thresh, n_valid, cls_ref, gated_ref):
    # cls_ref:   (1, C, tile_n) class-major scores of one batch element.
    # gated_ref: (1, 1, tile_n) gated per-anchor max (lane-dense).
    tile_n = gated_ref.shape[-1]
    m = jnp.max(cls_ref[...], axis=1, keepdims=True)           # sublane reduce
    # NOTE: uses >= (matches OpenPCDet's class_agnostic_nms score mask).
    gated = jnp.where(m >= score_thresh, m, -jnp.inf)
    # Force padded / out-of-range anchors to -inf, independent of pad value
    # and threshold sign.
    col = (jax.lax.broadcasted_iota(jnp.int32, m.shape, 2)
           + pl.program_id(1) * tile_n)
    gated_ref[...] = jnp.where(col < n_valid, gated, -jnp.inf)


def gated_proposal_scores(cls_preds, score_thresh, *, max_tile=65536,
                          single_block_cutoff=16384):
    """cls_preds: (B, N, C) student dense class preds.
    Returns (B, N) gated scores (max over classes, -inf below threshold)."""
    B, N, C = cls_preds.shape
    tile_n, N_pad = _plan_tiles(N, max_tile=max_tile,
                                single_block_cutoff=single_block_cutoff)

    # Class-major relayout.  The pad (only when N-tiling requires it) sits
    # right next to the transpose so XLA fuses both into one copy; padded
    # lanes are additionally forced to -inf inside the kernel.
    # TODO(synk): a class-major producer would remove this copy entirely.
    cls_t = jnp.transpose(cls_preds, (0, 2, 1))                 # (B, C, N)
    if N_pad != N:
        cls_t = jnp.pad(cls_t, ((0, 0), (0, 0), (0, N_pad - N)))

    gated = pl.pallas_call(
        functools.partial(_gated_score_kernel, float(score_thresh), N),
        out_shape=jax.ShapeDtypeStruct((B, 1, N_pad), cls_preds.dtype),
        grid=(B, N_pad // tile_n),
        in_specs=[pl.BlockSpec((1, C, tile_n), lambda b, j: (b, 0, j))],
        out_specs=pl.BlockSpec((1, 1, tile_n), lambda b, j: (b, 0, j)),
        compiler_params=pltpu.CompilerParams(
            dimension_semantics=("parallel", "parallel")),
    )(cls_t)

    gated = gated.reshape(B, N_pad)                             # free reshape
    return gated if N_pad == N else gated[:, :N]


# ----------------------------------------------------------------------------
# Final KD outputs — plain JAX on purpose (perf review: a Pallas launch for
# ~B*P ~ 200 elements is pure overhead; XLA fuses these two elementwise ops).
# ----------------------------------------------------------------------------
def kd_outputs(cls_selected, select_mask, rcnn_cls):
    """cls_selected: (B, P, C), select_mask: (B, P), rcnn_cls: (B*P, 1).
    Returns cls_preds_kd_stu (B*P, 1), cls_preds_kd_tea (B*P, 1)."""
    B, P, C = cls_selected.shape
    cls2d = cls_selected.reshape(B * P, C)
    mask = select_mask.reshape(B * P, 1)
    stu = jnp.max(cls2d, axis=1, keepdims=True) * mask.astype(cls2d.dtype)
    tea = rcnn_cls * mask.astype(rcnn_cls.dtype)
    return stu, tea


# ----------------------------------------------------------------------------
# Glue (plain JAX): proposal_layer_stu2tea + forward
# ----------------------------------------------------------------------------
def proposal_layer_stu2tea(batch_dict, nms_post_maxsize, score_thresh):
    batch_size = batch_dict['batch_size']
    box_preds_tea = batch_dict['batch_box_preds_tea_densehead']    # (B, N, 7)
    cls_preds_stu = batch_dict['batch_cls_preds']                  # (B, N, C)
    dense_cls_preds_stu = batch_dict['cls_preds'].reshape(
        batch_size, -1, cls_preds_stu.shape[-1])                   # (B, N, C)

    # Pallas hot path: per-anchor class max fused with score-threshold gating.
    gated = gated_proposal_scores(cls_preds_stu, score_thresh)     # (B, N)

    # TODO(synk): IoU-based class_agnostic_nms_minor suppression has no clean
    # Pallas equivalent; selection here is score-threshold + top-k only, with
    # suppressed slots zero-masked (fixed-shape convention).
    topk_scores, topk_idx = jax.lax.top_k(gated, nms_post_maxsize)  # (B, P)
    # NOTE: isfinite also drops NaN scores (slightly stricter than >= thresh).
    valid = jnp.isfinite(topk_scores).astype(cls_preds_stu.dtype)   # (B, P)

    rois_reverse = jnp.take_along_axis(box_preds_tea,
                                       topk_idx[..., None], axis=1)
    rois_reverse = rois_reverse * valid[..., None]
    cls_select_reverse = jnp.take_along_axis(dense_cls_preds_stu,
                                             topk_idx[..., None], axis=1)
    cls_select_reverse = cls_select_reverse * valid[..., None]

    batch_dict['rois_new_tea'] = rois_reverse
    batch_dict['cls_preds_selected_kd'] = cls_select_reverse
    batch_dict['select_mask'] = valid
    return batch_dict


def kd_point_trans_forward(batch_dict, nms_post_maxsize=100, score_thresh=0.3):
    batch_dict = proposal_layer_stu2tea(batch_dict, nms_post_maxsize,
                                        score_thresh)
    batch_dict['re_run_tea_flag'] = True
    roi_tmp = batch_dict['rois']
    batch_dict['rois'] = batch_dict['rois_new_tea']
    # TODO(synk): teacher_model.roi_head is an external network; its output
    # `rcnn_cls_stu_to_tea` is supplied as a synthetic input tensor instead.
    rcnn_cls_stu_to_tea = batch_dict['rcnn_cls_stu_to_tea']        # (B*P, 1)
    batch_dict['rois'] = roi_tmp
    batch_dict['re_run_tea_flag'] = None

    select_mask = batch_dict['select_mask']                        # (B, P)
    cls_sel = batch_dict['cls_preds_selected_kd']                  # (B, P, C)
    stu, tea = kd_outputs(cls_sel, select_mask, rcnn_cls_stu_to_tea)
    batch_dict['cls_preds_selected_kd'] = cls_sel.reshape(
        -1, cls_sel.shape[-1])
    batch_dict['cls_preds_kd_stu'] = stu
    batch_dict['cls_preds_kd_tea'] = tea
    return batch_dict


# ----------------------------------------------------------------------------
# Self-test
# ----------------------------------------------------------------------------
if __name__ == "__main__":
    key = jax.random.PRNGKey(0)
    B, N, C, BOX = 2, 300, 3, 7       # N not a multiple of 128
    P = 100                           # NMS_POST_MAXSIZE
    SCORE_THRESH = 0.3                # SCORE_THRESH_MINOR

    k1, k2, k3, k4, k5, k6 = jax.random.split(key, 6)
    batch_cls_preds = jax.random.uniform(k1, (B, N, C), dtype=jnp.float32)
    batch_box_preds = jax.random.normal(k2, (B, N, BOX), dtype=jnp.float32)
    batch_box_preds_tea = jax.random.normal(k3, (B, N, BOX), dtype=jnp.float32)
    batch_cls_preds_tea = jax.random.uniform(k4, (B, N, C), dtype=jnp.float32)
    rcnn_cls_stu_to_tea = jax.random.uniform(k5, (B * P, 1), dtype=jnp.float32)

    batch_dict = {
        'batch_size': B,
        'batch_cls_preds': batch_cls_preds,
        'batch_box_preds': batch_box_preds,
        'batch_box_preds_tea_densehead': batch_box_preds_tea,
        'batch_cls_preds_tea_densehead': batch_cls_preds_tea,
        'cls_preds': batch_cls_preds,                 # dense head cls preds
        'rois': batch_box_preds_tea[:, :P, :],
        'rcnn_cls_stu_to_tea': rcnn_cls_stu_to_tea,
    }

    def _ref_gated(cls, thresh):
        m = cls.max(axis=-1)
        return jnp.where(m >= thresh, m, jnp.full_like(m, -jnp.inf))

    # --- check kernel (fused max + threshold gating), single-block path ---
    gated = jax.block_until_ready(
        gated_proposal_scores(batch_cls_preds, SCORE_THRESH))
    assert gated.shape == (B, N)
    assert bool(jnp.array_equal(gated, _ref_gated(batch_cls_preds,
                                                  SCORE_THRESH)))

    # --- check kernel on the tiled + padded path (exercises in-kernel
    #     -inf masking of the ragged tail) ---
    big_cls = jax.random.uniform(k6, (B, 1000, C), dtype=jnp.float32)
    gated_big = jax.block_until_ready(
        gated_proposal_scores(big_cls, SCORE_THRESH,
                              max_tile=512, single_block_cutoff=256))
    assert gated_big.shape == (B, 1000)
    assert bool(jnp.array_equal(gated_big, _ref_gated(big_cls, SCORE_THRESH)))

    # --- full forward + check KD outputs against plain-JAX reference ---
    out = kd_point_trans_forward(batch_dict, nms_post_maxsize=P,
                                 score_thresh=SCORE_THRESH)
    stu = jax.block_until_ready(out['cls_preds_kd_stu'])
    tea = jax.block_until_ready(out['cls_preds_kd_tea'])

    cls_sel = out['cls_preds_selected_kd']            # (B*P, C)
    mask = out['select_mask'].reshape(-1, 1)
    ref_stu = cls_sel.max(axis=1, keepdims=True) * mask
    ref_tea = rcnn_cls_stu_to_tea * mask
    assert stu.shape == (B * P, 1) and tea.shape == (B * P, 1)
    assert jnp.allclose(stu, ref_stu, atol=1e-6)
    assert jnp.allclose(tea, ref_tea, atol=1e-6)

    print("KERNEL_OK")
</pallas_src>

<mosaic_0001>
module attributes {stable_mosaic.version = 11 : i64} {
  func.func @_gated_score_kernel(%arg0: i32, %arg1: i32, %arg2: memref<1x3x300xf32, #tpu.memory_space<vmem>>, %arg3: memref<1x1x300xf32, #tpu.memory_space<vmem>>) attributes {dimension_semantics = [#tpu.dimension_semantics<parallel>, #tpu.dimension_semantics<parallel>], iteration_bounds = array<i64: 2, 1>, scalar_prefetch = 0 : i64, scratch_operands = 0 : i64, tpu.core_type = #tpu.core_type<tc>, window_params = [{transform_indices = @transform_0, window_bounds = array<i64: 1, 3, 300>}, {transform_indices = @transform_1, window_bounds = array<i64: 1, 1, 300>}]} {
    %c0 = arith.constant 0 : index
    %c0_0 = arith.constant 0 : index
    %c0_1 = arith.constant 0 : index
    %0 = vector.load %arg2[%c0, %c0_0, %c0_1] : memref<1x3x300xf32, #tpu.memory_space<vmem>>, vector<1x3x300xf32>
    %cst = arith.constant dense<0xFF800000> : vector<1x300xf32>
    %1 = vector.multi_reduction <maximumf>, %0, %cst [1] : vector<1x3x300xf32> to vector<1x300xf32>
    %2 = vector.shape_cast %1 : vector<1x300xf32> to vector<1x1x300xf32>
    %cst_2 = arith.constant 3.000000e-01 : f32
    %3 = vector.broadcast %cst_2 : f32 to vector<1x1x300xf32>
    %4 = arith.cmpf oge, %2, %3 : vector<1x1x300xf32>
    %cst_3 = arith.constant 0xFF800000 : f32
    %5 = vector.broadcast %cst_3 : f32 to vector<1x1x300xf32>
    %6 = arith.select %4, %2, %5 : vector<1x1x300xi1>, vector<1x1x300xf32>
    %7 = tpu.iota {dimensions = array<i32: 2>} : vector<1x1x300xi32>
    %c300_i32 = arith.constant 300 : i32
    %8 = arith.muli %arg1, %c300_i32 : i32
    %9 = vector.broadcast %8 : i32 to vector<1x1x300xi32>
    %10 = arith.addi %7, %9 : vector<1x1x300xi32>
    %c300_i32_4 = arith.constant 300 : i32
    %11 = vector.broadcast %c300_i32_4 : i32 to vector<1x1x300xi32>
    %12 = arith.cmpi slt, %10, %11 : vector<1x1x300xi32>
    %cst_5 = arith.constant 0xFF800000 : f32
    %13 = vector.broadcast %cst_5 : f32 to vector<1x1x300xf32>
    %14 = arith.select %12, %6, %13 : vector<1x1x300xi1>, vector<1x1x300xf32>
    %c0_6 = arith.constant 0 : index
    %c0_7 = arith.constant 0 : index
    %c0_8 = arith.constant 0 : index
    %15 = vector.load %arg3[%c0_6, %c0_7, %c0_8] : memref<1x1x300xf32, #tpu.memory_space<vmem>>, vector<1x1x300xf32>
    tpu.vector_store %arg3[%c0_6, %c0_7, %c0_8], %14 {strides = array<i32>} : memref<1x1x300xf32, #tpu.memory_space<vmem>>, vector<1x1x300xf32>,
    return
  }
  func.func @transform_0(%arg0: i32, %arg1: i32) -> (i32, i32, i32) {
    %c0_i32 = arith.constant 0 : i32
    %c0_i32_0 = arith.constant 0 : i32
    return %arg0, %c0_i32, %arg1 : i32, i32, i32
  }
  func.func @transform_1(%arg0: i32, %arg1: i32) -> (i32, i32, i32) {
    %c0_i32 = arith.constant 0 : i32
    %c0_i32_0 = arith.constant 0 : i32
    return %arg0, %c0_i32, %arg1 : i32, i32, i32
  }
}

</mosaic_0001>

<llo_original>
// kernel: tpu_custom_call.1
$region0: #{tpu_custom_call.1}
  #allocation0 [shape = 'u32[]', space=smem, size = 0x4, offset = 0x4, fixed_abs, tag = 'smem constant byte address 0x4 - core index']
  #allocation1 [shape = 'u32[144,128]{1,0:T(1,128)}', space=vmem, size = 0x12000, scoped, tag = 'internal scratch']
  %s0 = inlined_call_operand.vmem [shape: f32[2,3,300], index: 0, kind: input, shape index: {}]
  %s1 = inlined_call_operand.hbm [shape: f32[2,1,300], index: 1, kind: output, shape index: {}]
  %s2 = sld [smem:[#allocation0]]
  $region37: #{tpu_custom_call.1} parent=0
    _
  %s4 = ssub.s32 1, %s2
  %s5 = scalar_select 0, %s4, %s2
  $region1: #{tpu_custom_call.1} parent=0
    #allocation2 [shape = 'u8[3072]{0}', space=vmem, size = 0xc00, scoped, tag = 'output window, operand 0']
    #allocation3 [shape = 's32[2]{0}', space=sflag, size = 0x8, scoped, tag = 'scoped memory for tpu_custom_call.1']
    %6 = vsyncpa [#allocation3], 0
    %s7 = scalar_lea.sflag [#allocation3], 1
    %8 = vsyncpa %s7, 0
    loop: start=0, step=1, limit=4
    $region2: #{tpu_custom_call.1} parent=1 // loop_pre_header
      _
    $region3: #{tpu_custom_call.1} parent=1 // loop_header
      %s10 = sphi 0, %s14
      %p11 = scmp.ge.s32.totalorder %s10, 4
      %s17 = sphi 0, %s29
      %s18 = sphi 0, %s25
      %s19 = sphi 0, %s17
      %s20 = sphi 0, %s18
      %s21 = sphi 0, %s19
      %s22 = sphi 0, %s20
      %s34 = sphi 0, %s36
      %s37 = sphi 0, %s34
      %s38 = sphi 0, %s37
      %s54 = sphi 0, %s38
      %s62 = sphi 0, %s64
      %s65 = sphi 0, %s62
      %s66 = sphi 0, %s65
      %s82 = sphi 0, %s66
    $region4: #{tpu_custom_call.1} parent=1 // loop_header_branch
      %13 = sbr.rel (%p11) target = $region8
    $region5: #{tpu_custom_call.1} parent=1 // loop_body
      %s15 = ssub.s32 %s10, 1
      %s16 = ssub.s32 %s10, 2
      %s23 = sadd.s32 1, %s18
      %p24 = scmp.ge.s32.totalorder %s23, 1
      %s25 = scalar_select %p24, 0, %s23
      %s26 = sadd.s32 1, %s17
      %s27 = scalar_select %p24, %s26, %s17
      %p28 = scmp.ge.s32.totalorder %s27, 2
      %s29 = scalar_select %p28, 0, %s27
      %s30 = ssub.s32 %s17, %s29
      %s31 = ssub.s32 %s18, %s25
      %s32 = sor.u32 %s30, %s31
      %p33 = scmp.eq.s32.totalorder %s32, 0
      %s35 = sadd.s32 %s34, 1
      %s36 = scalar_select %p33, %s34, %s35
      %p39 = pneg %p33
      %p40 = scmp.eq.s32.totalorder %s10, 1
      %p41 = por %p39, %p40
      %p42 = scmp.ne.s32.totalorder %s34, %s37
      %p43 = scmp.eq.s32.totalorder %s10, 0
      %p44 = por %p42, %p43
      %p45 = scmp.ne.s32.totalorder %s34, %s37
      %p46 = scmp.eq.s32.totalorder %s15, 1
      %p47 = por %p45, %p46
      %p48 = scmp.ne.s32.totalorder %s37, %s38
      %p49 = scmp.eq.s32.totalorder %s15, 0
      %p50 = por %p48, %p49
      %p51 = scmp.ne.s32.totalorder %s37, %s38
      %p52 = scmp.eq.s32.totalorder %s16, 1
      %p53 = por %p51, %p52
      %p55 = scmp.ne.s32.totalorder %s38, %s54
      %p56 = scmp.eq.s32.totalorder %s16, 0
      %p57 = por %p55, %p56
      %s58 = ssub.s32 %s17, %s29
      %s59 = ssub.s32 %s18, %s25
      %s60 = sor.u32 %s58, %s59
      %p61 = scmp.eq.s32.totalorder %s60, 0
      %s63 = sadd.s32 %s62, 1
      %s64 = scalar_select %p61, %s62, %s63
      %p67 = pneg %p61
      %p68 = scmp.eq.s32.totalorder %s10, 1
      %p69 = por %p67, %p68
      %p70 = scmp.ne.s32.totalorder %s62, %s65
      %p71 = scmp.eq.s32.totalorder %s10, 0
      %p72 = por %p70, %p71
      %p73 = scmp.ne.s32.totalorder %s62, %s65
      %p74 = scmp.eq.s32.totalorder %s15, 1
      %p75 = por %p73, %p74
      %p76 = scmp.ne.s32.totalorder %s65, %s66
      %p77 = scmp.eq.s32.totalorder %s15, 0
      %p78 = por %p76, %p77
      %p79 = scmp.ne.s32.totalorder %s65, %s66
      %p80 = scmp.eq.s32.totalorder %s16, 1
      %p81 = por %p79, %p80
      %p83 = scmp.ne.s32.totalorder %s66, %s82
      %p84 = scmp.eq.s32.totalorder %s16, 0
      %p85 = por %p83, %p84
      %p86 = scmp.le.s32.totalorder 1, %s10
      %p87 = scmp.lt.s32.totalorder %s10, 3
      %p88 = pnand %p86, %p87
      %p89 = pneg %p88
      // Predicated region
      $region9: #{tpu_custom_call.1} parent=5 // pred_check
        _
      $region10: #{tpu_custom_call.1} parent=5 // pred_check_branch
        %91 = sbr.rel (%p88) target = $region12
      $region11: #{tpu_custom_call.1} parent=5 // pred_region
        %s92 = ssub.s32 %s10, 1
      $region12: #{tpu_custom_call.1} parent=5 // pred_fallthru
        _
      %p93 = scmp.lt.s32.totalorder %s10, 2
      // Predicated region
      $region13: #{tpu_custom_call.1} parent=5 // pred_check
        %p94 = pneg %p93
      $region14: #{tpu_custom_call.1} parent=5 // pred_check_branch
        %96 = sbr.rel (%p94) target = $region16
      $region15: #{tpu_custom_call.1} parent=5 // pred_region
        // Predicated region
        $region17: #{tpu_custom_call.1} parent=15 // pred_check
          %p97 = pneg %p44
        $region18: #{tpu_custom_call.1} parent=15 // pred_check_branch
          %99 = sbr.rel (%p97) target = $region20
        $region19: #{tpu_custom_call.1} parent=15 // pred_region
          %s100 = smul.u32 3, %s18
          %p101 = scmp.lt.s32.totalorder %s17, 1
          %s102 = scalar_select %p101, %s17, 1
          %p103 = scmp.lt.s32.totalorder %s100, 2
          %s104 = scalar_select %p103, %s100, 2
          %s105 = smul.addr %s102, 3
          %s106 = sadd.s32 %s104, %s105
          %s107 = smul.addr %s106, 4
          %s108 = scalar_lea.vmem %s0, %s107
          %s109 = smul.u32 3, %s18
        $region20: #{tpu_custom_call.1} parent=15 // pred_fallthru
          _
      $region16: #{tpu_custom_call.1} parent=5 // pred_fallthru
        _
      %p110 = scmp.le.s32.totalorder 1, %s10
      %p111 = scmp.lt.s32.totalorder %s10, 3
      %p112 = pnand %p110, %p111
      %p113 = pneg %p112
      // Predicated region
      $region21: #{tpu_custom_call.1} parent=5 // pred_check
        _
      $region22: #{tpu_custom_call.1} parent=5 // pred_check_branch
        %115 = sbr.rel (%p112) target = $region24
      $region23: #{tpu_custom_call.1} parent=5 // pred_region
        %s116 = ssub.s32 %s10, 1
        %s117 = smul.u32 3, %s20
        %p118 = scmp.lt.s32.totalorder %s19, 1
        %s119 = scalar_select %p118, %s19, 1
        %p120 = scmp.lt.s32.totalorder %s117, 2
        %s121 = scalar_select %p120, %s117, 2
        %s122 = smul.addr %s119, 3
        %s123 = sadd.s32 %s121, %s122
        %s124 = smul.addr %s123, 4
        %s125 = scalar_lea.vmem %s0, %s124
        %p126 = pneg %p50
        %p127 = pneg %p47
        %p128 = pneg %p78
        %p129 = pneg %p75
        %s130 = sand.u32 %s65, 1
        %s131 = scalar_lea.sflag [#allocation3], %s130
        %s132 = sand.u32 %s65, 1
        %s133 = smul.addr %s132, 3
        %s134 = scalar_lea.vmem [#allocation2], %s133
        %s135 = smul.u32 3, %s20
        %p136 = scmp.lt.s32.totalorder %s19, 1
        %s137 = scalar_select %p136, %s19, 1
        %p138 = scmp.lt.s32.totalorder %s135, 2
        %s139 = scalar_select %p138, %s135, 2
        %s140 = smul.addr %s137, 3
        %s141 = sadd.s32 %s139, %s140
        %s142 = smul.addr %s141, 4
        %s143 = scalar_lea.vmem %s0, %s142
        %s144 = smul.u32 3, %s20
        %s145 = smul.u32 3, %s20
        %v146 = vld [vmem:[%s143] sm:$0x77]
        %v147 = vld [vmem:[%s143 + $0x8] sm:$0x7]
        %v149 = vcombine.high %v146, %v146
        %vm151 = vcmask 1042432
        %v152 = vsel %vm151, %v146, -inf
        %v153 = vrot.slane %v152, 4
        %v154 = vmax.f32 %v152, %v153
        %v155 = vrot.slane %v154, 2
        %v156 = vmax.f32 %v154, %v155
        %v157 = vrot.slane %v156, 1
        %v158 = vmax.f32 %v156, %v157
        %v159 = vsel %vm151, %v149, -inf
        %v160 = vrot.slane %v159, 4
        %v161 = vmax.f32 %v159, %v160
        %v162 = vrot.slane %v161, 2
        %v163 = vmax.f32 %v161, %v162
        %v164 = vrot.slane %v163, 1
        %v165 = vmax.f32 %v163, %v164
        %vm166 = vcmask 354304
        %v167 = vsel %vm166, %v147, -inf
        %v168 = vrot.slane %v167, 4
        %v169 = vmax.f32 %v167, %v168
        %v170 = vrot.slane %v169, 2
        %v171 = vmax.f32 %v169, %v170
        %v172 = vrot.slane %v171, 1
        %v173 = vmax.f32 %v171, %v172
        %vm174 = vcmp.ge.f32.partialorder %v158, 0.3
        %vm175 = vcmp.ge.f32.partialorder %v165, 0.3
        %vm176 = vcmp.ge.f32.partialorder %v173, 0.3
        %v177 = vsel %vm174, %v158, -inf
        %v178 = vsel %vm175, %v165, -inf
        %v179 = vsel %vm176, %v173, -inf
        %v180 = vlaneseq
        %v181 = vand.u32 %v180, 127
        %v182 = vadd.s32 %v181, 128
        %v183 = vadd.s32 %v181, 256
        %s184 = smul.u32 %s20, 300
        %v185 = vstv %s184
        %v186 = vadd.s32 %v181, %v185
        %v187 = vadd.s32 %v182, %v185
        %v188 = vadd.s32 %v183, %v185
        %vm189 = vcmp.lt.s32.totalorder %v186, 300
        %vm190 = vcmp.lt.s32.totalorder %v187, 300
        %vm191 = vcmp.lt.s32.totalorder %v188, 300
        %v192 = vsel %vm189, %v177, -inf
        %v193 = vsel %vm190, %v178, -inf
        %v194 = vsel %vm191, %v179, -inf
        %v198 = vcombine.low %v192, %v193
        %v200 = vunpack.c.l.s4 1966171168
        %v201 = vunpack.c.0.s8 %v200
        %v202 = vlaneseq
        %v203 = vshrl.u32 %v202, 7
        %v204 = vsub.s32 %v201, %v203
        %v205 = vrot.slane %v198, %v204
        %v207 = vunpack.c.l.s4 1966171168
        %v208 = vunpack.c.0.s8 %v207
        %v209 = vlaneseq
        %v210 = vshrl.u32 %v209, 7
        %v211 = vsub.s32 %v208, %v210
        %v212 = vrot.slane %v194, %v211
        %v213 = vcombine.low %v205, %v212
        %v215 = vunpack.c.l.s4 1966171168
        %v216 = vunpack.c.0.s8 %v215
        %v217 = vlaneseq
        %v218 = vshrl.u32 %v217, 7
        %v219 = vsub.s32 %v216, %v218
        %v220 = vrot.slane %v213, %v219
        %v222 = vlaneseq
        %vm223 = vcmp.ge.s32.totalorder %v222, 0
        %vm224 = vcmp.lt.s32.totalorder %v222, 300
        %vm225 = vmand %vm223, %vm224
        %226 = vst.msk [vmem:[%s134] sm:$0x7] %vm225, %v220
        %s227 = sand.u32 %s65, 1
        %s228 = scalar_lea.sflag [#allocation3], %s227
        %s229 = sand.u32 %s65, 1
        %s230 = smul.addr %s229, 3
        %s231 = scalar_lea.vmem [#allocation2], %s230
        // Predicated region
        $region25: #{tpu_custom_call.1} parent=23 // pred_check
          %p232 = pneg %p75
        $region26: #{tpu_custom_call.1} parent=23 // pred_check_branch
          %234 = sbr.rel (%p232) target = $region28
        $region27: #{tpu_custom_call.1} parent=23 // pred_region
          %s235 = smul.u32 3, %s20
          %s237 = ssub.s32 48, 48
          %238 = vsyncadd %s228, %s237
          %s239 = smul.addr %s19, 3
          %s240 = sadd.s32 %s235, %s239
          %s241 = smul.addr %s240, 16
          %s242 = scalar_lea.hbm %s1, %s241
          %s244 = sshll.u32 %s231, 4
          %s245 = int_to_ptr.vmem [resolvable:$true] %s244
          %247 = dma.vmem_to_hbm [thread:$0]  %s245, 48, %s242, %s228
        $region28: #{tpu_custom_call.1} parent=23 // pred_fallthru
          _
      $region24: #{tpu_custom_call.1} parent=5 // pred_fallthru
        _
      %p248 = scmp.le.s32.totalorder 2, %s10
      // Predicated region
      $region29: #{tpu_custom_call.1} parent=5 // pred_check
        %p249 = pneg %p248
      $region30: #{tpu_custom_call.1} parent=5 // pred_check_branch
        %251 = sbr.rel (%p249) target = $region32
      $region31: #{tpu_custom_call.1} parent=5 // pred_region
        %s252 = ssub.s32 %s10, 2
        // Predicated region
        $region33: #{tpu_custom_call.1} parent=31 // pred_check
          %p253 = pneg %p81
        $region34: #{tpu_custom_call.1} parent=31 // pred_check_branch
          %255 = sbr.rel (%p253) target = $region36
        $region35: #{tpu_custom_call.1} parent=31 // pred_region
          %s256 = sand.u32 %s66, 1
          %s257 = scalar_lea.sflag [#allocation3], %s256
          %s258 = sand.u32 %s66, 1
          %s259 = smul.addr %s258, 3
          %s260 = scalar_lea.vmem [#allocation2], %s259
          %261 = dma.done %s257, 48
        $region36: #{tpu_custom_call.1} parent=31 // pred_fallthru
          _
      $region32: #{tpu_custom_call.1} parent=5 // pred_fallthru
        _
    $region6: #{tpu_custom_call.1} parent=1 // loop_footer
      %s14 = sadd.s32 1, %s10
    $region7: #{tpu_custom_call.1} parent=1 // loop_footer_branch
      %9 = sbr.rel target = $region3
    $region8: #{tpu_custom_call.1} parent=1 // loop_exit
      _
    %262 = vsyncpa [#allocation3], 1
    %s263 = scalar_lea.sflag [#allocation3], 1
    %264 = vsyncpa %s263, 1

</llo_original>
